<compile_context>
chip_gen: v6e
topology: v6e:2x2x1
jax: 0.10.0
libtpu: 0.0.40
codegen_flags: <defaults>
</compile_context>

<pallas_src>
import functools

import jax
import jax.numpy as jnp
from jax.experimental import pallas as pl
from jax.experimental.pallas import tpu as pltpu

IN_F, H1, H2, OUT_F = 38, 64, 32, 1
K_PAD = 64          # x feature dim padded to 64 lanes (IN_F=38)
LANE = 128          # hidden feature dims padded to one lane tile
SUB = 8             # sublane tile
TILE = 128          # batch-tile granularity
BN_EPS = 1e-5
DEFAULT_TB = 4096   # batch rows per grid step (sweep 2048-8192 for large batch)


def _round_up(n, m):
    return ((n + m - 1) // m) * m


def _pad2(a, rows, cols, dtype):
    out = jnp.zeros((rows, cols), dtype)
    return out.at[: a.shape[0], : a.shape[1]].set(a.astype(dtype))


def init_params(key):
    """PyTorch-default-style init. Weights stored as (in_features, out_features)."""
    ks = jax.random.split(key, 6)

    def linear(kw, kb, fan_in, fan_out):
        bound = 1.0 / jnp.sqrt(jnp.float32(fan_in))
        w = jax.random.uniform(kw, (fan_in, fan_out), jnp.float32, -bound, bound)
        b = jax.random.uniform(kb, (fan_out,), jnp.float32, -bound, bound)
        return w, b

    w1, b1 = linear(ks[0], ks[1], IN_F, H1)
    w2, b2 = linear(ks[2], ks[3], H1, H2)
    w3, b3 = linear(ks[4], ks[5], H2, OUT_F)

    def bn(n):
        return dict(gamma=jnp.ones((n,), jnp.float32),
                    beta=jnp.zeros((n,), jnp.float32),
                    mean=jnp.zeros((n,), jnp.float32),
                    var=jnp.ones((n,), jnp.float32))

    return dict(w1=w1, b1=b1, w2=w2, b2=b2, w3=w3, b3=b3, bn1=bn(H1), bn2=bn(H2))


def fnn_reference(x, p):
    """Pure-f32 eval-mode reference matching the PyTorch module."""
    def bn_apply(h, bn):
        scale = bn["gamma"] * jax.lax.rsqrt(bn["var"] + BN_EPS)
        return (h - bn["mean"]) * scale + bn["beta"]

    h = jnp.maximum(x @ p["w1"] + p["b1"], 0.0)
    h = bn_apply(h, p["bn1"])            # dropout: identity in eval mode
    h = jnp.maximum(h @ p["w2"] + p["b2"], 0.0)
    h = bn_apply(h, p["bn2"])            # dropout: identity in eval mode
    return h @ p["w3"] + p["b3"]


def fold_bn(p):
    """Fold both BatchNorm layers into the following Linear layer (valid because
    BN's affine follows a ReLU, so it commutes into the next matmul).
    NOTE: must be recomputed if BN stats / gamma / beta / weights change."""
    def scale_shift(bn):
        s = bn["gamma"] * jax.lax.rsqrt(bn["var"] + BN_EPS)
        t = bn["beta"] - bn["mean"] * s
        return s, t

    s1, t1 = scale_shift(p["bn1"])
    s2, t2 = scale_shift(p["bn2"])
    w2f = s1[:, None] * p["w2"]
    b2f = t1 @ p["w2"] + p["b2"]
    w3f = s2[:, None] * p["w3"]
    b3f = t2 @ p["w3"] + p["b3"]         # shape (1,)
    return dict(w1=p["w1"], b1=p["b1"], w2=w2f, b2=b2f, w3=w3f, b3=b3f)


def prepare_params(p):
    """One-time prep: BN fold + lane padding + bf16 weight cast."""
    f = fold_bn(p)
    w1p = _pad2(f["w1"], K_PAD, LANE, jnp.bfloat16)       # (64,128)
    w2p = _pad2(f["w2"], LANE, LANE, jnp.bfloat16)        # (128,128) BN1 folded
    w3p = _pad2(f["w3"].T, SUB, LANE, jnp.bfloat16)       # (8,128), row 0 = w3 (BN2 folded)
    biases = jnp.zeros((SUB, LANE), jnp.float32)          # single resident bias slab
    biases = biases.at[0, :H1].set(f["b1"])
    biases = biases.at[1, :H2].set(f["b2"])
    b3 = f["b3"].astype(jnp.float32)                      # (1,) scalar, lives in SMEM
    return dict(w1=w1p, w2=w2p, w3=w3p, biases=biases, b3=b3)


def fnn_kernel(x_ref, w1_ref, w2_ref, w3_ref, bias_ref, b3_ref, o_ref):
    # fc1 + ReLU   (Dropout = identity; BN1 folded into fc2).
    # bf16 operands into the MXU, f32 accumulation; bias/ReLU in f32 (v5e VPU).
    h1 = jnp.dot(x_ref[...], w1_ref[...],
                 preferred_element_type=jnp.float32) + bias_ref[0:1, :]
    h1 = jnp.maximum(h1, 0.0)
    # fc2 (BN1-folded) + ReLU   (Dropout = identity; BN2 folded into fc3)
    h2 = jnp.dot(h1.astype(jnp.bfloat16), w2_ref[...],
                 preferred_element_type=jnp.float32) + bias_ref[1:2, :]
    h2 = jnp.maximum(h2, 0.0)
    # fc3 (BN2-folded), lane-dense output: w3 (8,128) contracted with h2 (TB,128)
    # along dim 1 of both -> (8,TB); row 0 carries the TB scalar outputs
    # (remaining rows are b3-only garbage, discarded on host).
    o = jax.lax.dot_general(
        w3_ref[...], h2.astype(jnp.bfloat16),
        dimension_numbers=(((1,), (1,)), ((), ())),
        preferred_element_type=jnp.float32)
    o_ref[...] = (o + b3_ref[0]).astype(o_ref.dtype)


@functools.partial(jax.jit, static_argnames=("tb",))
def _fnn_forward_padded(xp, kp, *, tb):
    bp = xp.shape[0]
    num_tiles = bp // tb
    resident = lambda shape: pl.BlockSpec(shape, lambda i: (0, 0))
    return pl.pallas_call(
        fnn_kernel,
        # bf16 lane-dense output slab: (8, bp), grid step i writes columns
        # [i*tb, (i+1)*tb) of all 8 rows (unmasked vst; tb is a multiple of 128).
        out_shape=jax.ShapeDtypeStruct((SUB, bp), jnp.bfloat16),
        grid=(num_tiles,),
        in_specs=[
            pl.BlockSpec((tb, K_PAD), lambda i: (i, 0)),        # x streams (64-lane rows)
            resident((K_PAD, LANE)),                            # w1 (VMEM-resident)
            resident((LANE, LANE)),                             # w2 folded
            resident((SUB, LANE)),                              # w3 row-block
            resident((SUB, LANE)),                              # bias slab
            pl.BlockSpec(memory_space=pltpu.MemorySpace.SMEM),  # b3 scalar
        ],
        out_specs=pl.BlockSpec((SUB, tb), lambda i: (0, i)),
        compiler_params=pltpu.CompilerParams(
            dimension_semantics=("parallel",)),
    )(xp, kp["w1"], kp["w2"], kp["w3"], kp["biases"], kp["b3"])


def _choose_tb(batch, tb_max=DEFAULT_TB):
    bp = _round_up(max(int(batch), 1), TILE)
    tb = max(TILE, min(_round_up(tb_max, TILE), bp))
    # v7x: keep >= 2 grid tiles whenever there is enough work, so
    # dimension_semantics=("parallel",) can shard the batch across both TCs.
    if bp > TILE and bp // tb < 2:
        tb = _round_up((bp + 1) // 2, TILE)
    return tb


def prepare_input(x, tb):
    """Pad x once to a (round_up(batch, tb), 64)-lane bf16 slab.
    In production keep x stored in this layout upstream so no per-call pad pass
    (and its extra HBM read/write) is needed."""
    batch = x.shape[0]
    bp = _round_up(batch, tb)
    xp = jnp.zeros((bp, K_PAD), jnp.bfloat16)
    return xp.at[:batch, :IN_F].set(x.astype(jnp.bfloat16))


def fnn_forward_prepadded(xp, kp, batch, *, tb):
    """Forward on pre-padded bf16 input of shape (round_up(batch, tb), 64)."""
    assert xp.shape[1] == K_PAD and xp.shape[0] % tb == 0
    out = _fnn_forward_padded(xp, kp, tb=tb)       # (8, bp) bf16
    # Row 0 holds the results; padded batch rows are independent garbage.
    return out[0, :batch].astype(jnp.float32)[:, None]


def fnn_forward(x, kp, *, tb=None):
    """Convenience wrapper: pads x per call (prefer the pre-padded path)."""
    batch = x.shape[0]
    tb = _choose_tb(batch, DEFAULT_TB if tb is None else tb)
    xp = prepare_input(x, tb)
    return fnn_forward_prepadded(xp, kp, batch, tb=tb)


def reference_bf16_mirror(x, folded):
    """Mirror the kernel's bf16-operand / f32-accumulate / bf16-output arithmetic."""
    bf = lambda a: a.astype(jnp.bfloat16)
    h1 = jnp.dot(bf(x), bf(folded["w1"]),
                 preferred_element_type=jnp.float32) + folded["b1"]
    h1 = jnp.maximum(h1, 0.0)
    h2 = jnp.dot(bf(h1), bf(folded["w2"]),
                 preferred_element_type=jnp.float32) + folded["b2"]
    h2 = jnp.maximum(h2, 0.0)
    o = jnp.dot(bf(h2), bf(folded["w3"]),
                preferred_element_type=jnp.float32) + folded["b3"]
    return o.astype(jnp.bfloat16).astype(jnp.float32)


if __name__ == "__main__":
    key = jax.random.PRNGKey(0)
    k_param, k_x = jax.random.split(key)
    params = init_params(k_param)
    folded = fold_bn(params)
    kparams = prepare_params(params)

    batch = 4
    x = jax.random.normal(k_x, (batch, IN_F), jnp.float32)

    y = fnn_forward(x, kparams)
    y = jax.block_until_ready(y)
    assert y.shape == (batch, OUT_F), y.shape

    y_mirror = reference_bf16_mirror(x, folded)   # same bf16 rounding as kernel
    y_f32 = fnn_reference(x, params)              # exact eval-mode f32 reference
    assert jnp.allclose(y, y_mirror, atol=2e-2, rtol=2e-2), (y, y_mirror)
    assert jnp.allclose(y, y_f32, atol=1e-1, rtol=1e-1), (y, y_f32)
    print("KERNEL_OK")
</pallas_src>

<mosaic_0001>
module attributes {stable_mosaic.version = 11 : i64} {
  func.func @fnn_kernel(%arg0: i32, %arg1: memref<128x64xbf16, #tpu.memory_space<vmem>>, %arg2: memref<64x128xbf16, #tpu.memory_space<vmem>>, %arg3: memref<128x128xbf16, #tpu.memory_space<vmem>>, %arg4: memref<8x128xbf16, #tpu.memory_space<vmem>>, %arg5: memref<8x128xf32, #tpu.memory_space<vmem>>, %arg6: memref<1xf32, #tpu.memory_space<smem>>, %arg7: memref<8x128xbf16, #tpu.memory_space<vmem>>) attributes {dimension_semantics = [#tpu.dimension_semantics<parallel>], iteration_bounds = array<i64: 1>, scalar_prefetch = 0 : i64, scratch_operands = 0 : i64, tpu.core_type = #tpu.core_type<tc>, window_params = [{transform_indices = @transform_0, window_bounds = array<i64: 128, 64>}, {pipeline_mode = #tpu.pipeline_mode<synchronous>, transform_indices = @transform_1, window_bounds = array<i64: 64, 128>}, {pipeline_mode = #tpu.pipeline_mode<synchronous>, transform_indices = @transform_2, window_bounds = array<i64: 128, 128>}, {pipeline_mode = #tpu.pipeline_mode<synchronous>, transform_indices = @transform_3, window_bounds = array<i64: 8, 128>}, {pipeline_mode = #tpu.pipeline_mode<synchronous>, transform_indices = @transform_4, window_bounds = array<i64: 8, 128>}, {transform_indices = @transform_5, window_bounds = array<i64: 1>}, {transform_indices = @transform_6, window_bounds = array<i64: 8, 128>}]} {
    %c0 = arith.constant 0 : index
    %c0_0 = arith.constant 0 : index
    %0 = vector.load %arg1[%c0, %c0_0] : memref<128x64xbf16, #tpu.memory_space<vmem>>, vector<128x64xbf16>
    %c0_1 = arith.constant 0 : index
    %c0_2 = arith.constant 0 : index
    %1 = vector.load %arg2[%c0_1, %c0_2] : memref<64x128xbf16, #tpu.memory_space<vmem>>, vector<64x128xbf16>
    %cst = arith.constant dense<0.000000e+00> : vector<128x128xf32>
    %2 = tpu.matmul %0, %1, %cst {dimension_numbers = #tpu.dot_dimension_numbers<[1], [0], [0], [1], [0, 0, 1, 1], [], []>} : vector<128x64xbf16>, vector<64x128xbf16>, vector<128x128xf32> -> vector<128x128xf32>
    %c0_3 = arith.constant 0 : index
    %c0_4 = arith.constant 0 : index
    %3 = vector.load %arg5[%c0_3, %c0_4] : memref<8x128xf32, #tpu.memory_space<vmem>>, vector<1x128xf32>
    %4 = vector.broadcast %3 : vector<1x128xf32> to vector<128x128xf32>
    %5 = arith.addf %2, %4 : vector<128x128xf32>
    %cst_5 = arith.constant 0.000000e+00 : f32
    %6 = vector.broadcast %cst_5 : f32 to vector<128x128xf32>
    %7 = arith.maximumf %5, %6 : vector<128x128xf32>
    %8 = arith.truncf %7 : vector<128x128xf32> to vector<128x128xbf16>
    %c0_6 = arith.constant 0 : index
    %c0_7 = arith.constant 0 : index
    %9 = vector.load %arg3[%c0_6, %c0_7] : memref<128x128xbf16, #tpu.memory_space<vmem>>, vector<128x128xbf16>
    %cst_8 = arith.constant dense<0.000000e+00> : vector<128x128xf32>
    %10 = tpu.matmul %8, %9, %cst_8 {dimension_numbers = #tpu.dot_dimension_numbers<[1], [0], [0], [1], [0, 0, 1, 1], [], []>} : vector<128x128xbf16>, vector<128x128xbf16>, vector<128x128xf32> -> vector<128x128xf32>
    %c1 = arith.constant 1 : index
    %c0_9 = arith.constant 0 : index
    %11 = vector.load %arg5[%c1, %c0_9] : memref<8x128xf32, #tpu.memory_space<vmem>>, vector<1x128xf32>
    %12 = vector.broadcast %11 : vector<1x128xf32> to vector<128x128xf32>
    %13 = arith.addf %10, %12 : vector<128x128xf32>
    %cst_10 = arith.constant 0.000000e+00 : f32
    %14 = vector.broadcast %cst_10 : f32 to vector<128x128xf32>
    %15 = arith.maximumf %13, %14 : vector<128x128xf32>
    %c0_11 = arith.constant 0 : index
    %c0_12 = arith.constant 0 : index
    %16 = vector.load %arg4[%c0_11, %c0_12] : memref<8x128xbf16, #tpu.memory_space<vmem>>, vector<8x128xbf16>
    %17 = arith.truncf %15 : vector<128x128xf32> to vector<128x128xbf16>
    %cst_13 = arith.constant dense<0.000000e+00> : vector<8x128xf32>
    %18 = tpu.matmul %16, %17, %cst_13 {dimension_numbers = #tpu.dot_dimension_numbers<[1], [1], [0], [0], [0, 0, 1, 0], [], []>} : vector<8x128xbf16>, vector<128x128xbf16>, vector<8x128xf32> -> vector<8x128xf32>
    %c0_14 = arith.constant 0 : index
    %19 = memref.load %arg6[%c0_14] : memref<1xf32, #tpu.memory_space<smem>>
    %20 = vector.broadcast %19 : f32 to vector<8x128xf32>
    %21 = arith.addf %18, %20 : vector<8x128xf32>
    %22 = arith.truncf %21 : vector<8x128xf32> to vector<8x128xbf16>
    %c0_15 = arith.constant 0 : index
    %c0_16 = arith.constant 0 : index
    %23 = vector.load %arg7[%c0_15, %c0_16] : memref<8x128xbf16, #tpu.memory_space<vmem>>, vector<8x128xbf16>
    tpu.vector_store %arg7[%c0_15, %c0_16], %22 {strides = array<i32>} : memref<8x128xbf16, #tpu.memory_space<vmem>>, vector<8x128xbf16>,
    return
  }
  func.func @transform_0(%arg0: i32) -> (i32, i32) {
    %c0_i32 = arith.constant 0 : i32
    %c0_i32_0 = arith.constant 0 : i32
    return %arg0, %c0_i32 : i32, i32
  }
  func.func @transform_1(%arg0: i32) -> (i32, i32) {
    %c0_i32 = arith.constant 0 : i32
    %c0_i32_0 = arith.constant 0 : i32
    %c0_i32_1 = arith.constant 0 : i32
    return %c0_i32, %c0_i32_0 : i32, i32
  }
  func.func @transform_2(%arg0: i32) -> (i32, i32) {
    %c0_i32 = arith.constant 0 : i32
    %c0_i32_0 = arith.constant 0 : i32
    %c0_i32_1 = arith.constant 0 : i32
    return %c0_i32, %c0_i32_0 : i32, i32
  }
  func.func @transform_3(%arg0: i32) -> (i32, i32) {
    %c0_i32 = arith.constant 0 : i32
    %c0_i32_0 = arith.constant 0 : i32
    %c0_i32_1 = arith.constant 0 : i32
    return %c0_i32, %c0_i32_0 : i32, i32
  }
  func.func @transform_4(%arg0: i32) -> (i32, i32) {
    %c0_i32 = arith.constant 0 : i32
    %c0_i32_0 = arith.constant 0 : i32
    %c0_i32_1 = arith.constant 0 : i32
    return %c0_i32, %c0_i32_0 : i32, i32
  }
  func.func @transform_5(%arg0: i32) -> i32 {
    %c0_i32 = arith.constant 0 : i32
    %c0_i32_0 = arith.constant 0 : i32
    return %c0_i32 : i32
  }
  func.func @transform_6(%arg0: i32) -> (i32, i32) {
    %c0_i32 = arith.constant 0 : i32
    %c0_i32_0 = arith.constant 0 : i32
    return %c0_i32, %arg0 : i32, i32
  }
}

</mosaic_0001>

<llo_original>
// kernel: _fnn_forward_padded.1
$region0: #{_fnn_forward_padded.1}
  #allocation0 [shape = 'u32[]', space=smem, size = 0x4, offset = 0x4, fixed_abs, tag = 'smem constant byte address 0x4 - core index']
  #allocation1 [shape = 'u32[144,128]{1,0:T(1,128)}', space=vmem, size = 0x12000, scoped, tag = 'internal scratch']
  #allocation2 [shape = 'f32[1]{0:T(128)S(6)}', space=smem, size = 0x200, scoped, tag = 'scoped memory for _fnn_forward_padded.1']
  %s0 = inlined_call_operand.vmem [shape: bf16[128,64], index: 0, kind: input, shape index: {}]
  %s1 = inlined_call_operand.vmem [shape: bf16[64,128], index: 1, kind: input, shape index: {}]
  %s2 = inlined_call_operand.vmem [shape: bf16[128,128], index: 2, kind: input, shape index: {}]
  %s3 = inlined_call_operand.vmem [shape: bf16[8,128], index: 3, kind: input, shape index: {}]
  %s4 = inlined_call_operand.hbm [shape: f32[8,128], index: 4, kind: input, shape index: {}]
  %s5 = inlined_call_operand.<no memory space> [shape: f32[1], index: 5, kind: input, shape index: {}]
  %s6 = inlined_call_operand.hbm [shape: bf16[8,128], index: 6, kind: output, shape index: {}]
  %s7 = sld [smem:[#allocation0]]
  $region38: #{_fnn_forward_padded.1} parent=0
    _
  %s9 = ssub.s32 1, %s7
  %s10 = scalar_select 0, %s9, %s7
  %11 = sst [smem:[#allocation2]] %s5
  $region1: #{_fnn_forward_padded.1} parent=0
    #allocation3 [shape = 'u8[4096]{0}', space=vmem, size = 0x1000, scoped, tag = 'input window, operand 4, single buffered']
    #allocation4 [shape = 's32[1]{0}', space=sflag, size = 0x4, scoped, tag = 'scoped memory for _fnn_forward_padded.1']
    #allocation5 [shape = 's32[1]{0}', space=sflag, size = 0x4, scoped, tag = 'scoped memory for _fnn_forward_padded.1']
    #allocation6 [shape = 'u8[2048]{0}', space=vmem, size = 0x800, scoped, tag = 'output window, operand 0, single buffered']
    %12 = vsyncpa [#allocation4], 0
    %13 = vsyncpa [#allocation5], 0
    // Predicated region
    $region2: #{_fnn_forward_padded.1} parent=1 // pred_check
      _
    $region3: #{_fnn_forward_padded.1} parent=1 // pred_check_branch
      %15 = sbr.rel (0) target = $region5
    $region4: #{_fnn_forward_padded.1} parent=1 // pred_region
      _
    $region5: #{_fnn_forward_padded.1} parent=1 // pred_fallthru
      _
    // Predicated region
    $region6: #{_fnn_forward_padded.1} parent=1 // pred_check
      _
    $region7: #{_fnn_forward_padded.1} parent=1 // pred_check_branch
      %17 = sbr.rel (0) target = $region9
    $region8: #{_fnn_forward_padded.1} parent=1 // pred_region
      _
    $region9: #{_fnn_forward_padded.1} parent=1 // pred_fallthru
      _
    // Predicated region
    $region10: #{_fnn_forward_padded.1} parent=1 // pred_check
      _
    $region11: #{_fnn_forward_padded.1} parent=1 // pred_check_branch
      %19 = sbr.rel (0) target = $region13
    $region12: #{_fnn_forward_padded.1} parent=1 // pred_region
      _
    $region13: #{_fnn_forward_padded.1} parent=1 // pred_fallthru
      _
    // Predicated region
    $region14: #{_fnn_forward_padded.1} parent=1 // pred_check
      _
    $region15: #{_fnn_forward_padded.1} parent=1 // pred_check_branch
      %21 = sbr.rel (0) target = $region17
    $region16: #{_fnn_forward_padded.1} parent=1 // pred_region
      _
    $region17: #{_fnn_forward_padded.1} parent=1 // pred_fallthru
      _
    // Predicated region
    $region18: #{_fnn_forward_padded.1} parent=1 // pred_check
      _
    $region19: #{_fnn_forward_padded.1} parent=1 // pred_check_branch
      %23 = sbr.rel (0) target = $region21
    $region20: #{_fnn_forward_padded.1} parent=1 // pred_region
      %s25 = ssub.s32 128, 128
      %26 = vsyncadd [#allocation4], %s25
      %s28 = sshll.u32 [#allocation3], 4
      %s29 = int_to_ptr.vmem [resolvable:$true] %s28
      %31 = dma.hbm_to_vmem [thread:$0]  %s4, 128, %s29, [#allocation4]
    $region21: #{_fnn_forward_padded.1} parent=1 // pred_fallthru
      _
    // Predicated region
    $region22: #{_fnn_forward_padded.1} parent=1 // pred_check
      _
    $region23: #{_fnn_forward_padded.1} parent=1 // pred_check_branch
      %33 = sbr.rel (0) target = $region25
    $region24: #{_fnn_forward_padded.1} parent=1 // pred_region
      _
    $region25: #{_fnn_forward_padded.1} parent=1 // pred_fallthru
      _
    // Predicated region
    $region26: #{_fnn_forward_padded.1} parent=1 // pred_check
      _
    $region27: #{_fnn_forward_padded.1} parent=1 // pred_check_branch
      %35 = sbr.rel (0) target = $region29
    $region28: #{_fnn_forward_padded.1} parent=1 // pred_region
      %36 = dma.done [#allocation4], 128
    $region29: #{_fnn_forward_padded.1} parent=1 // pred_fallthru
      _
    %v38 = vld [vmem:[%s0] sm:$0xf]
    %v39 = vld [vmem:[%s0 + $0x4] sm:$0xf]
    %v40 = vld [vmem:[%s0 + $0x8] sm:$0xf]
    %v41 = vld [vmem:[%s0 + $0xc] sm:$0xf]
    %v42 = vld [vmem:[%s0 + $0x10] sm:$0xf]
    %v43 = vld [vmem:[%s0 + $0x14] sm:$0xf]
    %v44 = vld [vmem:[%s0 + $0x18] sm:$0xf]
    %v45 = vld [vmem:[%s0 + $0x1c] sm:$0xf]
    %v46 = vld [vmem:[%s0 + $0x20] sm:$0xf]
    %v47 = vld [vmem:[%s0 + $0x24] sm:$0xf]
    %v48 = vld [vmem:[%s0 + $0x28] sm:$0xf]
    %v49 = vld [vmem:[%s0 + $0x2c] sm:$0xf]
    %v50 = vld [vmem:[%s0 + $0x30] sm:$0xf]
    %v51 = vld [vmem:[%s0 + $0x34] sm:$0xf]
    %v52 = vld [vmem:[%s0 + $0x38] sm:$0xf]
    %v53 = vld [vmem:[%s0 + $0x3c] sm:$0xf]
    %v54 = vld [vmem:[%s1] sm:$0xf]
    %v55 = vld [vmem:[%s1 + $0x4] sm:$0xf]
    %v56 = vld [vmem:[%s1 + $0x8] sm:$0xf]
    %v57 = vld [vmem:[%s1 + $0xc] sm:$0xf]
    %v58 = vld [vmem:[%s1 + $0x10] sm:$0xf]
    %v59 = vld [vmem:[%s1 + $0x14] sm:$0xf]
    %v60 = vld [vmem:[%s1 + $0x18] sm:$0xf]
    %v61 = vld [vmem:[%s1 + $0x1c] sm:$0xf]
    %v62 = vld [vmem:[#allocation3] sm:$0x1]
    %v63 = vlaneseq
    %v64 = vshrl.u32 %v63, 7
    %v65 = vsub.s32 0, %v64
    %v66 = vrot.slane %v62, %v65
    %v83 = vunpack.c.l.b16 %v38
    %v84 = vunpack.c.l.b16 %v39
    %v85 = vunpack.c.l.b16 %v40
    %v86 = vunpack.c.l.b16 %v41
    %v87 = vunpack.c.l.b16 %v42
    %v88 = vunpack.c.l.b16 %v43
    %v89 = vunpack.c.l.b16 %v44
    %v90 = vunpack.c.l.b16 %v45
    %v91 = vunpack.c.l.b16 %v46
    %v92 = vunpack.c.l.b16 %v47
    %v93 = vunpack.c.l.b16 %v48
    %v94 = vunpack.c.l.b16 %v49
    %v95 = vunpack.c.l.b16 %v50
    %v96 = vunpack.c.l.b16 %v51
    %v97 = vunpack.c.l.b16 %v52
    %v98 = vunpack.c.l.b16 %v53
    %v99 = vpack.c.b16 %v84, %v83
    %v100 = vpack.c.b16 %v86, %v85
    %v101 = vpack.c.b16 %v88, %v87
    %v102 = vpack.c.b16 %v90, %v89
    %v103 = vpack.c.b16 %v92, %v91
    %v104 = vpack.c.b16 %v94, %v93
    %v105 = vpack.c.b16 %v96, %v95
    %v106 = vpack.c.b16 %v98, %v97
    %v115 = vunpack.c.l.b16 %v54
    %v116 = vunpack.c.l.b16 %v55
    %v117 = vunpack.c.l.b16 %v56
    %v118 = vunpack.c.l.b16 %v57
    %v119 = vunpack.c.l.b16 %v58
    %v120 = vunpack.c.l.b16 %v59
    %v121 = vunpack.c.l.b16 %v60
    %v122 = vunpack.c.l.b16 %v61
    %v123 = vpack.c.b16 %v116, %v115
    %v124 = vpack.c.b16 %v118, %v117
    %v125 = vpack.c.b16 %v120, %v119
    %v126 = vpack.c.b16 %v122, %v121
    %vm131 = vcmask 523264
    %v133 = vsel %vm131, %v99, 0
    %v136 = vsel %vm131, %v100, 0
    %v139 = vsel %vm131, %v101, 0
    %v142 = vsel %vm131, %v102, 0
    %v145 = vsel %vm131, %v103, 0
    %v148 = vsel %vm131, %v104, 0
    %v151 = vsel %vm131, %v105, 0
    %v154 = vsel %vm131, %v106, 0
    %156 = vmatprep.subr.bf16.mxu0 0
    %157 = vmatpush1.bf16.msra.mxu0 0
    %158 = vmatprep.subr.bf16.mxu0 0
    %159 = vmatpush1.bf16.msra.mxu0 0
    %160 = vmatprep.subr.bf16.mxu0 0
    %161 = vmatpush1.bf16.msra.mxu0 0
    %162 = vmatprep.subr.bf16.mxu0 0
    %163 = vmatpush1.bf16.msra.mxu0 0
    %164 = vmatprep.subr.bf16.mxu0 0
    %165 = vmatpush1.bf16.msra.mxu0 %v126
    %166 = vmatprep.subr.bf16.mxu0 0
    %167 = vmatpush1.bf16.msra.mxu0 %v125
    %168 = vmatprep.subr.bf16.mxu0 0
    %169 = vmatpush1.bf16.msra.mxu0 %v124
    %170 = vmatprep.subr.bf16.mxu0 0
    %171 = vmatpush1.bf16.msra.mxu0 %v123
    %172 = vmatprep.subr.bf16.mxu0 0
    %173 = vmatpush2.bf16.msra.mxu0 0
    %174 = vmatprep.subr.bf16.mxu0 0
    %175 = vmatpush2.bf16.msra.mxu0 0
    %176 = vmatprep.subr.bf16.mxu0 0
    %177 = vmatpush2.bf16.msra.mxu0 0
    %178 = vmatprep.subr.bf16.mxu0 0
    %179 = vmatpush2.bf16.msra.mxu0 0
    %180 = vmatprep.subr.bf16.mxu0 0
    %181 = vmatpush2.bf16.msra.mxu0 0
    %182 = vmatprep.subr.bf16.mxu0 0
    %183 = vmatpush2.bf16.msra.mxu0 0
    %184 = vmatprep.subr.bf16.mxu0 0
    %185 = vmatpush2.bf16.msra.mxu0 0
    %186 = vmatprep.subr.bf16.mxu0 0
    %187 = vmatpush2.bf16.msra.mxu0 0
    %188 = vmatprep.mubr.bf16.mxu0 0
    %189 = vmatmul.mubr.bf16.gmra.mxu0 %v133
    %v190 = vpop.f32.mrf.mxu0
    %v191 = vadd.f32 %v66, %v190
    %v192 = vpop.f32.mrf.mxu0
    %v193 = vpop.f32.mrf.mxu0
    %v194 = vadd.f32 %v66, %v193
    %v195 = vpop.f32.mrf.mxu0
    %196 = vmatprep.mubr.bf16.mxu0 0
    %197 = vmatmul.mubr.bf16.gmra.mxu0 %v136
    %v198 = vpop.f32.mrf.mxu0
    %v199 = vadd.f32 %v66, %v198
    %v200 = vpop.f32.mrf.mxu0
    %v201 = vpop.f32.mrf.mxu0
    %v202 = vadd.f32 %v66, %v201
    %v203 = vpop.f32.mrf.mxu0
    %204 = vmatprep.mubr.bf16.mxu0 0
    %205 = vmatmul.mubr.bf16.gmra.mxu0 %v139
    %v206 = vpop.f32.mrf.mxu0
    %v207 = vadd.f32 %v66, %v206
    %v208 = vpop.f32.mrf.mxu0
    %v209 = vpop.f32.mrf.mxu0
    %v210 = vadd.f32 %v66, %v209
    %v211 = vpop.f32.mrf.mxu0
    %212 = vmatprep.mubr.bf16.mxu0 0
    %213 = vmatmul.mubr.bf16.gmra.mxu0 %v142
    %v214 = vpop.f32.mrf.mxu0
    %v215 = vadd.f32 %v66, %v214
    %v216 = vpop.f32.mrf.mxu0
    %v217 = vpop.f32.mrf.mxu0
    %v218 = vadd.f32 %v66, %v217
    %v219 = vpop.f32.mrf.mxu0
    %220 = vmatprep.mubr.bf16.mxu0 0
    %221 = vmatmul.mubr.bf16.gmra.mxu0 %v145
    %v222 = vpop.f32.mrf.mxu0
    %v223 = vadd.f32 %v66, %v222
    %v224 = vpop.f32.mrf.mxu0
    %v225 = vpop.f32.mrf.mxu0
    %v226 = vadd.f32 %v66, %v225
    %v227 = vpop.f32.mrf.mxu0
    %228 = vmatprep.mubr.bf16.mxu0 0
    %229 = vmatmul.mubr.bf16.gmra.mxu0 %v148
    %v230 = vpop.f32.mrf.mxu0
    %v231 = vadd.f32 %v66, %v230
    %v232 = vpop.f32.mrf.mxu0
    %v233 = vpop.f32.mrf.mxu0
    %v234 = vadd.f32 %v66, %v233
    %v235 = vpop.f32.mrf.mxu0
    %236 = vmatprep.mubr.bf16.mxu0 0
    %237 = vmatmul.mubr.bf16.gmra.mxu0 %v151
    %v238 = vpop.f32.mrf.mxu0
    %v239 = vadd.f32 %v66, %v238
    %v240 = vpop.f32.mrf.mxu0
    %v241 = vpop.f32.mrf.mxu0
    %v242 = vadd.f32 %v66, %v241
    %v243 = vpop.f32.mrf.mxu0
    %244 = vmatprep.mubr.bf16.mxu0 0
    %245 = vmatmul.mubr.bf16.gmra.mxu0 %v154
    %v246 = vpop.f32.mrf.mxu0
    %v247 = vadd.f32 %v66, %v246
    %v248 = vpop.f32.mrf.mxu0
    %v249 = vpop.f32.mrf.mxu0
    %v250 = vadd.f32 %v66, %v249
    %v251 = vpop.f32.mrf.mxu0
    %252 = vdwg.mxu0
    %v253 = vmax.f32 %v191, 0.0
    %v254 = vmax.f32 %v194, 0.0
    %v255 = vmax.f32 %v199, 0.0
    %v256 = vmax.f32 %v202, 0.0
    %v257 = vmax.f32 %v207, 0.0
    %v258 = vmax.f32 %v210, 0.0
    %v259 = vmax.f32 %v215, 0.0
    %v260 = vmax.f32 %v218, 0.0
    %v261 = vmax.f32 %v223, 0.0
    %v262 = vmax.f32 %v226, 0.0
    %v263 = vmax.f32 %v231, 0.0
    %v264 = vmax.f32 %v234, 0.0
    %v265 = vmax.f32 %v239, 0.0
    %v266 = vmax.f32 %v242, 0.0
    %v267 = vmax.f32 %v247, 0.0
    %v268 = vmax.f32 %v250, 0.0
    %v269 = vpack.c.bf16 %v254, %v253
    %v270 = vpack.c.bf16 %v256, %v255
    %v271 = vpack.c.bf16 %v258, %v257
    %v272 = vpack.c.bf16 %v260, %v259
    %v273 = vpack.c.bf16 %v262, %v261
    %v274 = vpack.c.bf16 %v264, %v263
    %v275 = vpack.c.bf16 %v266, %v265
    %v276 = vpack.c.bf16 %v268, %v267
    %v277 = vld [vmem:[%s2] sm:$0xf]
    %v278 = vld [vmem:[%s2 + $0x4] sm:$0xf]
    %v279 = vld [vmem:[%s2 + $0x8] sm:$0xf]
    %v280 = vld [vmem:[%s2 + $0xc] sm:$0xf]
    %v281 = vld [vmem:[%s2 + $0x10] sm:$0xf]
    %v282 = vld [vmem:[%s2 + $0x14] sm:$0xf]
    %v283 = vld [vmem:[%s2 + $0x18] sm:$0xf]
    %v284 = vld [vmem:[%s2 + $0x1c] sm:$0xf]
    %v285 = vld [vmem:[%s2 + $0x20] sm:$0xf]
    %v286 = vld [vmem:[%s2 + $0x24] sm:$0xf]
    %v287 = vld [vmem:[%s2 + $0x28] sm:$0xf]
    %v288 = vld [vmem:[%s2 + $0x2c] sm:$0xf]
    %v289 = vld [vmem:[%s2 + $0x30] sm:$0xf]
    %v290 = vld [vmem:[%s2 + $0x34] sm:$0xf]
    %v291 = vld [vmem:[%s2 + $0x38] sm:$0xf]
    %v292 = vld [vmem:[%s2 + $0x3c] sm:$0xf]
    %v293 = vld [vmem:[#allocation3 + $0x1] sm:$0x1]
    %v294 = vlaneseq
    %v295 = vshrl.u32 %v294, 7
    %v296 = vsub.s32 0, %v295
    %v297 = vrot.slane %v293, %v296
    %v314 = vunpack.c.l.b16 %v277
    %v315 = vunpack.c.l.b16 %v278
    %v316 = vunpack.c.l.b16 %v279
    %v317 = vunpack.c.l.b16 %v280
    %v318 = vunpack.c.l.b16 %v281
    %v319 = vunpack.c.l.b16 %v282
    %v320 = vunpack.c.l.b16 %v283
    %v321 = vunpack.c.l.b16 %v284
    %v322 = vunpack.c.l.b16 %v285
    %v323 = vunpack.c.l.b16 %v286
    %v324 = vunpack.c.l.b16 %v287
    %v325 = vunpack.c.l.b16 %v288
    %v326 = vunpack.c.l.b16 %v289
    %v327 = vunpack.c.l.b16 %v290
    %v328 = vunpack.c.l.b16 %v291
    %v329 = vunpack.c.l.b16 %v292
    %v330 = vpack.c.b16 %v315, %v314
    %v331 = vpack.c.b16 %v317, %v316
    %v332 = vpack.c.b16 %v319, %v318
    %v333 = vpack.c.b16 %v321, %v320
    %v334 = vpack.c.b16 %v323, %v322
    %v335 = vpack.c.b16 %v325, %v324
    %v336 = vpack.c.b16 %v327, %v326
    %v337 = vpack.c.b16 %v329, %v328
    %346 = vmatprep.subr.bf16.mxu0 0
    %347 = vmatpush1.bf16.msra.mxu0 %v337
    %348 = vmatprep.subr.bf16.mxu0 0
    %349 = vmatpush1.bf16.msra.mxu0 %v336
    %350 = vmatprep.subr.bf16.mxu0 0
    %351 = vmatpush1.bf16.msra.mxu0 %v335
    %352 = vmatprep.subr.bf16.mxu0 0
    %353 = vmatpush1.bf16.msra.mxu0 %v334
    %354 = vmatprep.subr.bf16.mxu0 0
    %355 = vmatpush1.bf16.msra.mxu0 %v333
    %356 = vmatprep.subr.bf16.mxu0 0
    %357 = vmatpush1.bf16.msra.mxu0 %v332
    %358 = vmatprep.subr.bf16.mxu0 0
    %359 = vmatpush1.bf16.msra.mxu0 %v331
    %360 = vmatprep.subr.bf16.mxu0 0
    %361 = vmatpush1.bf16.msra.mxu0 %v330
    %362 = vmatprep.subr.bf16.mxu0 0
    %363 = vmatpush2.bf16.msra.mxu0 0
    %364 = vmatprep.subr.bf16.mxu0 0
    %365 = vmatpush2.bf16.msra.mxu0 0
    %366 = vmatprep.subr.bf16.mxu0 0
    %367 = vmatpush2.bf16.msra.mxu0 0
    %368 = vmatprep.subr.bf16.mxu0 0
    %369 = vmatpush2.bf16.msra.mxu0 0
    %370 = vmatprep.subr.bf16.mxu0 0
    %371 = vmatpush2.bf16.msra.mxu0 0
    %372 = vmatprep.subr.bf16.mxu0 0
    %373 = vmatpush2.bf16.msra.mxu0 0
    %374 = vmatprep.subr.bf16.mxu0 0
    %375 = vmatpush2.bf16.msra.mxu0 0
    %376 = vmatprep.subr.bf16.mxu0 0
    %377 = vmatpush2.bf16.msra.mxu0 0
    %378 = vmatprep.mubr.bf16.mxu0 0
    %379 = vmatmul.mubr.bf16.gmra.mxu0 %v269
    %v380 = vpop.f32.mrf.mxu0
    %v381 = vadd.f32 %v297, %v380
    %v382 = vpop.f32.mrf.mxu0
    %v383 = vpop.f32.mrf.mxu0
    %v384 = vadd.f32 %v297, %v383
    %v385 = vpop.f32.mrf.mxu0
    %386 = vmatprep.mubr.bf16.mxu0 0
    %387 = vmatmul.mubr.bf16.gmra.mxu0 %v270
    %v388 = vpop.f32.mrf.mxu0
    %v389 = vadd.f32 %v297, %v388
    %v390 = vpop.f32.mrf.mxu0
    %v391 = vpop.f32.mrf.mxu0
    %v392 = vadd.f32 %v297, %v391
    %v393 = vpop.f32.mrf.mxu0
    %394 = vmatprep.mubr.bf16.mxu0 0
    %395 = vmatmul.mubr.bf16.gmra.mxu0 %v271
    %v396 = vpop.f32.mrf.mxu0
    %v397 = vadd.f32 %v297, %v396
    %v398 = vpop.f32.mrf.mxu0
    %v399 = vpop.f32.mrf.mxu0
    %v400 = vadd.f32 %v297, %v399
    %v401 = vpop.f32.mrf.mxu0
    %402 = vmatprep.mubr.bf16.mxu0 0
    %403 = vmatmul.mubr.bf16.gmra.mxu0 %v272
    %v404 = vpop.f32.mrf.mxu0
    %v405 = vadd.f32 %v297, %v404
    %v406 = vpop.f32.mrf.mxu0
    %v407 = vpop.f32.mrf.mxu0
    %v408 = vadd.f32 %v297, %v407
    %v409 = vpop.f32.mrf.mxu0
    %410 = vmatprep.mubr.bf16.mxu0 0
    %411 = vmatmul.mubr.bf16.gmra.mxu0 %v273
    %v412 = vpop.f32.mrf.mxu0
    %v413 = vadd.f32 %v297, %v412
    %v414 = vpop.f32.mrf.mxu0
    %v415 = vpop.f32.mrf.mxu0
    %v416 = vadd.f32 %v297, %v415
    %v417 = vpop.f32.mrf.mxu0
    %418 = vmatprep.mubr.bf16.mxu0 0
    %419 = vmatmul.mubr.bf16.gmra.mxu0 %v274
    %v420 = vpop.f32.mrf.mxu0
    %v421 = vadd.f32 %v297, %v420
    %v422 = vpop.f32.mrf.mxu0
    %v423 = vpop.f32.mrf.mxu0
    %v424 = vadd.f32 %v297, %v423
    %v425 = vpop.f32.mrf.mxu0
    %426 = vmatprep.mubr.bf16.mxu0 0
    %427 = vmatmul.mubr.bf16.gmra.mxu0 %v275
    %v428 = vpop.f32.mrf.mxu0
    %v429 = vadd.f32 %v297, %v428
    %v430 = vpop.f32.mrf.mxu0
    %v431 = vpop.f32.mrf.mxu0
    %v432 = vadd.f32 %v297, %v431
    %v433 = vpop.f32.mrf.mxu0
    %434 = vmatprep.mubr.bf16.mxu0 0
    %435 = vmatmul.mubr.bf16.gmra.mxu0 %v276
    %v436 = vpop.f32.mrf.mxu0
    %v437 = vadd.f32 %v297, %v436
    %v438 = vpop.f32.mrf.mxu0
    %v439 = vpop.f32.mrf.mxu0
    %v440 = vadd.f32 %v297, %v439
    %v441 = vpop.f32.mrf.mxu0
    %442 = vdwg.mxu0
    %v443 = vmax.f32 %v381, 0.0
    %v444 = vmax.f32 %v384, 0.0
    %v445 = vmax.f32 %v389, 0.0
    %v446 = vmax.f32 %v392, 0.0
    %v447 = vmax.f32 %v397, 0.0
    %v448 = vmax.f32 %v400, 0.0
    %v449 = vmax.f32 %v405, 0.0
    %v450 = vmax.f32 %v408, 0.0
    %v451 = vmax.f32 %v413, 0.0
    %v452 = vmax.f32 %v416, 0.0
    %v453 = vmax.f32 %v421, 0.0
    %v454 = vmax.f32 %v424, 0.0
    %v455 = vmax.f32 %v429, 0.0
    %v456 = vmax.f32 %v432, 0.0
    %v457 = vmax.f32 %v437, 0.0
    %v458 = vmax.f32 %v440, 0.0
    %v459 = vld [vmem:[%s3] sm:$0xf]
    %v460 = vpack.c.bf16 %v444, %v443
    %v461 = vpack.c.bf16 %v446, %v445
    %v462 = vpack.c.bf16 %v448, %v447
    %v463 = vpack.c.bf16 %v450, %v449
    %v464 = vpack.c.bf16 %v452, %v451
    %v465 = vpack.c.bf16 %v454, %v453
    %v466 = vpack.c.bf16 %v456, %v455
    %v467 = vpack.c.bf16 %v458, %v457
    %s468 = sld [smem:[#allocation2]]
    %v469 = vstv %s468
    %470 = vmatprep.subr.bf16.mxu0 0
    %471 = vmatpush1.bf16.xpose.msra.mxu0 %v467
    %472 = vmatprep.subr.bf16.mxu0 0
    %473 = vmatpush1.bf16.xpose.msra.mxu0 %v466
    %474 = vmatprep.subr.bf16.mxu0 0
    %475 = vmatpush1.bf16.xpose.msra.mxu0 %v465
    %476 = vmatprep.subr.bf16.mxu0 0
    %477 = vmatpush1.bf16.xpose.msra.mxu0 %v464
    %478 = vmatprep.subr.bf16.mxu0 0
    %479 = vmatpush1.bf16.xpose.msra.mxu0 %v463
    %480 = vmatprep.subr.bf16.mxu0 0
    %481 = vmatpush1.bf16.xpose.msra.mxu0 %v462
    %482 = vmatprep.subr.bf16.mxu0 0
    %483 = vmatpush1.bf16.xpose.msra.mxu0 %v461
    %484 = vmatprep.subr.bf16.mxu0 0
    %485 = vmatpush1.bf16.xpose.msra.mxu0 %v460
    %486 = vmatprep.subr.bf16.mxu0 0
    %487 = vmatpush2.bf16.xpose.msra.mxu0 0
    %488 = vmatprep.subr.bf16.mxu0 0
    %489 = vmatpush2.bf16.xpose.msra.mxu0 0
    %490 = vmatprep.subr.bf16.mxu0 0
    %491 = vmatpush2.bf16.xpose.msra.mxu0 0
    %492 = vmatprep.subr.bf16.mxu0 0
    %493 = vmatpush2.bf16.xpose.msra.mxu0 0
    %494 = vmatprep.subr.bf16.mxu0 0
    %495 = vmatpush2.bf16.xpose.msra.mxu0 0
    %496 = vmatprep.subr.bf16.mxu0 0
    %497 = vmatpush2.bf16.xpose.msra.mxu0 0
    %498 = vmatprep.subr.bf16.mxu0 0
    %499 = vmatpush2.bf16.xpose.msra.mxu0 0
    %500 = vmatprep.subr.bf16.mxu0 0
    %501 = vmatpush2.bf16.xpose.msra.mxu0 0
    %502 = vmatprep.mubr.bf16.mxu0 0
    %503 = vmatmul.mubr.bf16.gmra.mxu0 %v459
    %v504 = vpop.f32.mrf.mxu0
    %v505 = vadd.f32 %v469, %v504
    %v506 = vpop.f32.mrf.mxu0
    %v507 = vpop.f32.mrf.mxu0
    %v508 = vpop.f32.mrf.mxu0
    %509 = vdwg.mxu0
    %v510 = vpack.c.bf16 %v505, %v505
    %511 = vst [vmem:[#allocation6] sm:$0xf] %v510
    // Predicated region
    $region30: #{_fnn_forward_padded.1} parent=1 // pred_check
      _
    $region31: #{_fnn_forward_padded.1} parent=1 // pred_check_branch
      %513 = sbr.rel (0) target = $region33
    $region32: #{_fnn_forward_padded.1} parent=1 // pred_region
      %s515 = ssub.s32 64, 64
      %516 = vsyncadd [#allocation5], %s515
      %s518 = sshll.u32 [#allocation6], 4
      %s519 = int_to_ptr.vmem [resolvable:$true] %s518
      %521 = dma.vmem_to_hbm [thread:$0]  %s519, 64, %s6, [#allocation5]
    $region33: #{_fnn_forward_padded.1} parent=1 // pred_fallthru
      _
    // Predicated region
    $region34: #{_fnn_forward_padded.1} parent=1 // pred_check
      _
    $region35: #{_fnn_forward_padded.1} parent=1 // pred_check_branch
      %523 = sbr.rel (0) target = $region37
    $region36: #{_fnn_forward_padded.1} parent=1 // pred_region
      %524 = dma.done [#allocation5], 64
    $region37: #{_fnn_forward_padded.1} parent=1 // pred_fallthru
      _
    %525 = vsyncpa [#allocation4], 1
    %526 = vsyncpa [#allocation5], 1

</llo_original>
